<compile_context>
chip_gen: v5e
topology: v5e:2x2
jax: 0.10.0
libtpu: 0.0.40
codegen_flags: <defaults>
</compile_context>

<pallas_src>
import functools

import jax
import jax.numpy as jnp
from jax.experimental import pallas as pl
from jax.experimental.pallas import tpu as pltpu  # noqa: F401  (kept for the planned tiled version)

LANE = 128   # TPU lane width; feature dims padded to this for lane-dense stores
NPAD = 128   # node dim padded to this so adj / both matmuls are lane-dense


def gcn_fused_kernel(adj_ref, x_ref, w_ref, b_ref, out_ref, *, num_layers):
    """All GCNConv layers fused: h <- relu(adj @ (h @ W_i) + b_i)."""
    adj = adj_ref[...]            # (NPAD, NPAD) normalized adjacency, loaded once
    h = x_ref[...]                # (NPAD, LANE) zero-padded node features
    for i in range(num_layers):   # static unrolled loop; L is tiny
        # feature transform on the MXU
        xw = jnp.dot(h, w_ref[i], preferred_element_type=jnp.float32)
        # neighborhood aggregation on the MXU (K = NPAD = 128, MXU-dense)
        h = jnp.dot(adj, xw, preferred_element_type=jnp.float32)
        h = h + b_ref[i]          # broadcast (1, LANE) bias, f32 epilogue
        if i != num_layers - 1:
            h = jnp.maximum(h, 0.0)  # ReLU; dropout is identity in eval mode
    out_ref[...] = h.astype(out_ref.dtype)


def prepare_gcn_params(params):
    """One-time padding/stacking of layer params (kept OUT of the hot path).

    Padded columns of W and padded lanes of b are zero, so padded feature
    lanes stay exactly zero through bias, ReLU and the next contraction.
    """
    for w, _ in params:
        assert w.shape[0] <= LANE and w.shape[1] <= LANE, (
            "feature dims must be <= 128 for the single-block padding scheme")
    w_list, b_list = [], []
    for w, b in params:
        fi, fo = w.shape
        w_list.append(
            jnp.zeros((LANE, LANE), jnp.float32).at[:fi, :fo].set(w.astype(jnp.float32)))
        b_list.append(
            jnp.zeros((1, LANE), jnp.float32).at[:, :fo].set(b.astype(jnp.float32)))
    w_all = jnp.stack(w_list)            # (L, LANE, LANE)
    b_all = jnp.stack(b_list)            # (L, 1, LANE)
    out_dim = params[-1][0].shape[1]
    return w_all, b_all, out_dim


@functools.partial(jax.jit, static_argnames=("out_dim",))
def gcn_forward(x, adj, w_all, b_all, out_dim):
    """Fused forward pass of the GCN module (eval mode)."""
    n, in_dim = x.shape
    num_layers = w_all.shape[0]
    assert in_dim <= LANE, "in_dim must be <= 128 for the single-block padding scheme"
    assert n <= NPAD, "N must be <= 128; TODO(synk): row-tiled grid for larger graphs"

    # Zero-pad node and feature dims. Padded adj rows/cols are zero, so real
    # output rows are exact; padded rows only ever see the bias and never feed
    # back into real rows.
    x_p = jnp.zeros((NPAD, LANE), jnp.float32).at[:n, :in_dim].set(x.astype(jnp.float32))
    adj_p = jnp.zeros((NPAD, NPAD), jnp.float32).at[:n, :n].set(adj.astype(jnp.float32))

    kernel = functools.partial(gcn_fused_kernel, num_layers=num_layers)
    out_p = pl.pallas_call(
        kernel,
        out_shape=jax.ShapeDtypeStruct((NPAD, LANE), jnp.float32),
        in_specs=[
            pl.BlockSpec((NPAD, NPAD), lambda: (0, 0)),                 # adj (full, DMA'd once)
            pl.BlockSpec((NPAD, LANE), lambda: (0, 0)),                 # x (padded, lane-dense)
            pl.BlockSpec((num_layers, LANE, LANE), lambda: (0, 0, 0)),  # all W_i
            pl.BlockSpec((num_layers, 1, LANE), lambda: (0, 0, 0)),     # all b_i
        ],
        out_specs=pl.BlockSpec((NPAD, LANE), lambda: (0, 0)),
    )(adj_p, x_p, w_all, b_all)

    # slice the node-row and lane padding back off
    return out_p[:n, :out_dim]


def init_gcn_params(key, in_dim, lat_dim):
    """Deterministic Glorot-uniform weights + zero bias for each layer."""
    params = []
    dims = [in_dim] + list(lat_dim)
    for i in range(len(lat_dim)):
        key, wk = jax.random.split(key)
        fan_in, fan_out = dims[i], dims[i + 1]
        limit = (6.0 / (fan_in + fan_out)) ** 0.5
        w = jax.random.uniform(wk, (fan_in, fan_out), jnp.float32, -limit, limit)
        b = jnp.zeros((1, fan_out), jnp.float32)
        params.append((w, b))
    return params


def normalize_adj(adj):
    """Symmetric GCN normalization: D^-1/2 (A + I) D^-1/2  (plain-JAX glue)."""
    n = adj.shape[0]
    a_hat = adj + jnp.eye(n, dtype=adj.dtype)
    deg = jnp.sum(a_hat, axis=1)
    d_inv_sqrt = 1.0 / jnp.sqrt(jnp.maximum(deg, 1e-12))
    return a_hat * d_inv_sqrt[:, None] * d_inv_sqrt[None, :]


if __name__ == "__main__":
    # Small, module-consistent shapes: 64 nodes, in_dim=16, lat_dim=[32, 8].
    N = 64
    in_dim = 16
    lat_dim = [32, 8]

    key = jax.random.PRNGKey(0)
    kx, ka, kp = jax.random.split(key, 3)

    x = jax.random.normal(kx, (N, in_dim), jnp.float32)
    # random sparse-ish symmetric 0/1 adjacency
    a_raw = (jax.random.uniform(ka, (N, N)) < 0.1).astype(jnp.float32)
    adj = jnp.maximum(a_raw, a_raw.T)
    adj_hat = normalize_adj(adj)

    params = init_gcn_params(kp, in_dim, lat_dim)

    # One-time param preparation (padding/stacking) kept out of the hot path.
    w_all, b_all, out_dim = prepare_gcn_params(params)
    w_all = jax.block_until_ready(w_all)
    b_all = jax.block_until_ready(b_all)

    out = gcn_forward(x, adj_hat, w_all, b_all, out_dim)
    out = jax.block_until_ready(out)

    # quick sanity check vs plain-JAX reference (eval mode: dropout = identity)
    ref = x
    for i, (w, b) in enumerate(params):
        ref = adj_hat @ (ref @ w) + b
        if i != len(params) - 1:
            ref = jnp.maximum(ref, 0.0)
    assert out.shape == (N, lat_dim[-1])
    assert jnp.allclose(out, ref, atol=1e-4, rtol=1e-4)

    print("KERNEL_OK")
</pallas_src>

<mosaic_0001>
module attributes {stable_mosaic.version = 11 : i64} {
  func.func @gcn_fused_kernel(%arg0: memref<128x128xf32, #tpu.memory_space<vmem>>, %arg1: memref<128x128xf32, #tpu.memory_space<vmem>>, %arg2: memref<2x128x128xf32, #tpu.memory_space<vmem>>, %arg3: memref<2x1x128xf32, #tpu.memory_space<vmem>>, %arg4: memref<128x128xf32, #tpu.memory_space<vmem>>) attributes {dimension_semantics = [], scalar_prefetch = 0 : i64, scratch_operands = 0 : i64, tpu.core_type = #tpu.core_type<tc>} {
    %c0 = arith.constant 0 : index
    %c0_0 = arith.constant 0 : index
    %0 = vector.load %arg0[%c0, %c0_0] : memref<128x128xf32, #tpu.memory_space<vmem>>, vector<128x128xf32>
    %c0_1 = arith.constant 0 : index
    %c0_2 = arith.constant 0 : index
    %1 = vector.load %arg1[%c0_1, %c0_2] : memref<128x128xf32, #tpu.memory_space<vmem>>, vector<128x128xf32>
    %c0_3 = arith.constant 0 : index
    %c0_4 = arith.constant 0 : index
    %c0_5 = arith.constant 0 : index
    %2 = vector.load %arg2[%c0_3, %c0_4, %c0_5] : memref<2x128x128xf32, #tpu.memory_space<vmem>>, vector<1x128x128xf32>
    %3 = vector.shape_cast %2 : vector<1x128x128xf32> to vector<128x128xf32>
    %cst = arith.constant dense<0.000000e+00> : vector<128x128xf32>
    %4 = tpu.matmul %1, %3, %cst {dimension_numbers = #tpu.dot_dimension_numbers<[1], [0], [0], [1], [0, 0, 1, 1], [], []>} : vector<128x128xf32>, vector<128x128xf32>, vector<128x128xf32> -> vector<128x128xf32>
    %cst_6 = arith.constant dense<0.000000e+00> : vector<128x128xf32>
    %5 = tpu.matmul %0, %4, %cst_6 {dimension_numbers = #tpu.dot_dimension_numbers<[1], [0], [0], [1], [0, 0, 1, 1], [], []>} : vector<128x128xf32>, vector<128x128xf32>, vector<128x128xf32> -> vector<128x128xf32>
    %c0_7 = arith.constant 0 : index
    %c0_8 = arith.constant 0 : index
    %c0_9 = arith.constant 0 : index
    %6 = vector.load %arg3[%c0_7, %c0_8, %c0_9] : memref<2x1x128xf32, #tpu.memory_space<vmem>>, vector<1x1x128xf32>
    %7 = vector.shape_cast %6 : vector<1x1x128xf32> to vector<1x128xf32>
    %8 = vector.broadcast %7 : vector<1x128xf32> to vector<128x128xf32>
    %9 = arith.addf %5, %8 : vector<128x128xf32>
    %cst_10 = arith.constant 0.000000e+00 : f32
    %10 = vector.broadcast %cst_10 : f32 to vector<128x128xf32>
    %11 = arith.maximumf %9, %10 : vector<128x128xf32>
    %c1 = arith.constant 1 : index
    %c0_11 = arith.constant 0 : index
    %c0_12 = arith.constant 0 : index
    %12 = vector.load %arg2[%c1, %c0_11, %c0_12] : memref<2x128x128xf32, #tpu.memory_space<vmem>>, vector<1x128x128xf32>
    %13 = vector.shape_cast %12 : vector<1x128x128xf32> to vector<128x128xf32>
    %cst_13 = arith.constant dense<0.000000e+00> : vector<128x128xf32>
    %14 = tpu.matmul %11, %13, %cst_13 {dimension_numbers = #tpu.dot_dimension_numbers<[1], [0], [0], [1], [0, 0, 1, 1], [], []>} : vector<128x128xf32>, vector<128x128xf32>, vector<128x128xf32> -> vector<128x128xf32>
    %cst_14 = arith.constant dense<0.000000e+00> : vector<128x128xf32>
    %15 = tpu.matmul %0, %14, %cst_14 {dimension_numbers = #tpu.dot_dimension_numbers<[1], [0], [0], [1], [0, 0, 1, 1], [], []>} : vector<128x128xf32>, vector<128x128xf32>, vector<128x128xf32> -> vector<128x128xf32>
    %c1_15 = arith.constant 1 : index
    %c0_16 = arith.constant 0 : index
    %c0_17 = arith.constant 0 : index
    %16 = vector.load %arg3[%c1_15, %c0_16, %c0_17] : memref<2x1x128xf32, #tpu.memory_space<vmem>>, vector<1x1x128xf32>
    %17 = vector.shape_cast %16 : vector<1x1x128xf32> to vector<1x128xf32>
    %18 = vector.broadcast %17 : vector<1x128xf32> to vector<128x128xf32>
    %19 = arith.addf %15, %18 : vector<128x128xf32>
    %c0_18 = arith.constant 0 : index
    %c0_19 = arith.constant 0 : index
    %20 = vector.load %arg4[%c0_18, %c0_19] : memref<128x128xf32, #tpu.memory_space<vmem>>, vector<128x128xf32>
    tpu.vector_store %arg4[%c0_18, %c0_19], %19 {strides = array<i32>} : memref<128x128xf32, #tpu.memory_space<vmem>>, vector<128x128xf32>,
    return
  }
}

</mosaic_0001>

<llo_original>
// kernel: gcn_forward.1
$region0: #{gcn_forward.1}
  #allocation0 [shape = 'u32[]', space=smem, size = 0x4, offset = 0x4, fixed_abs, tag = 'smem constant byte address 0x4 - core index']
  #allocation1 [shape = 'u32[72,128]{1,0:T(1,128)}', space=vmem, size = 0x9000, scoped, tag = 'internal scratch']
  %s0 = inlined_call_operand.vmem [shape: f32[128,128], index: 0, kind: input, shape index: {}]
  %s1 = inlined_call_operand.vmem [shape: f32[128,128], index: 1, kind: input, shape index: {}]
  %s2 = inlined_call_operand.vmem [shape: f32[2,128,128], index: 2, kind: input, shape index: {}]
  %s3 = inlined_call_operand.vmem [shape: f32[2,1,128], index: 3, kind: input, shape index: {}]
  %s4 = inlined_call_operand.vmem [shape: f32[128,128], index: 4, kind: output, shape index: {}]
  %s5 = sld [smem:[#allocation0]]
  $region26: #{gcn_forward.1} parent=0
    _
  %s7 = ssub.s32 1, %s5
  %s8 = scalar_select 0, %s7, %s5
  // Predicated region
  $region2: #{gcn_forward.1} parent=0 // pred_check
    _
  $region3: #{gcn_forward.1} parent=0 // pred_check_branch
    %10 = sbr.rel (0) target = $region5
  $region4: #{gcn_forward.1} parent=0 // pred_region
    _
  $region5: #{gcn_forward.1} parent=0 // pred_fallthru
    _
  // Predicated region
  $region6: #{gcn_forward.1} parent=0 // pred_check
    _
  $region7: #{gcn_forward.1} parent=0 // pred_check_branch
    %12 = sbr.rel (0) target = $region9
  $region8: #{gcn_forward.1} parent=0 // pred_region
    _
  $region9: #{gcn_forward.1} parent=0 // pred_fallthru
    _
  // Predicated region
  $region10: #{gcn_forward.1} parent=0 // pred_check
    _
  $region11: #{gcn_forward.1} parent=0 // pred_check_branch
    %14 = sbr.rel (0) target = $region13
  $region12: #{gcn_forward.1} parent=0 // pred_region
    _
  $region13: #{gcn_forward.1} parent=0 // pred_fallthru
    _
  // Predicated region
  $region14: #{gcn_forward.1} parent=0 // pred_check
    _
  $region15: #{gcn_forward.1} parent=0 // pred_check_branch
    %16 = sbr.rel (0) target = $region17
  $region16: #{gcn_forward.1} parent=0 // pred_region
    _
  $region17: #{gcn_forward.1} parent=0 // pred_fallthru
    _
  %v17 = vld [vmem:[%s0] sm:$0xff]
  %v18 = vld [vmem:[%s0 + $0x8] sm:$0xff]
  %v19 = vld [vmem:[%s0 + $0x10] sm:$0xff]
  %v20 = vld [vmem:[%s0 + $0x18] sm:$0xff]
  %v21 = vld [vmem:[%s0 + $0x20] sm:$0xff]
  %v22 = vld [vmem:[%s0 + $0x28] sm:$0xff]
  %v23 = vld [vmem:[%s0 + $0x30] sm:$0xff]
  %v24 = vld [vmem:[%s0 + $0x38] sm:$0xff]
  %v25 = vld [vmem:[%s0 + $0x40] sm:$0xff]
  %v26 = vld [vmem:[%s0 + $0x48] sm:$0xff]
  %v27 = vld [vmem:[%s0 + $0x50] sm:$0xff]
  %v28 = vld [vmem:[%s0 + $0x58] sm:$0xff]
  %v29 = vld [vmem:[%s0 + $0x60] sm:$0xff]
  %v30 = vld [vmem:[%s0 + $0x68] sm:$0xff]
  %v31 = vld [vmem:[%s0 + $0x70] sm:$0xff]
  %v32 = vld [vmem:[%s0 + $0x78] sm:$0xff]
  %v33 = vld [vmem:[%s1] sm:$0xff]
  %v34 = vld [vmem:[%s1 + $0x8] sm:$0xff]
  %v35 = vld [vmem:[%s1 + $0x10] sm:$0xff]
  %v36 = vld [vmem:[%s1 + $0x18] sm:$0xff]
  %v37 = vld [vmem:[%s1 + $0x20] sm:$0xff]
  %v38 = vld [vmem:[%s1 + $0x28] sm:$0xff]
  %v39 = vld [vmem:[%s1 + $0x30] sm:$0xff]
  %v40 = vld [vmem:[%s1 + $0x38] sm:$0xff]
  %v41 = vld [vmem:[%s1 + $0x40] sm:$0xff]
  %v42 = vld [vmem:[%s1 + $0x48] sm:$0xff]
  %v43 = vld [vmem:[%s1 + $0x50] sm:$0xff]
  %v44 = vld [vmem:[%s1 + $0x58] sm:$0xff]
  %v45 = vld [vmem:[%s1 + $0x60] sm:$0xff]
  %v46 = vld [vmem:[%s1 + $0x68] sm:$0xff]
  %v47 = vld [vmem:[%s1 + $0x70] sm:$0xff]
  %v48 = vld [vmem:[%s1 + $0x78] sm:$0xff]
  %v49 = vld [vmem:[%s2] sm:$0xff]
  %v50 = vld [vmem:[%s2 + $0x8] sm:$0xff]
  %v51 = vld [vmem:[%s2 + $0x10] sm:$0xff]
  %v52 = vld [vmem:[%s2 + $0x18] sm:$0xff]
  %v53 = vld [vmem:[%s2 + $0x20] sm:$0xff]
  %v54 = vld [vmem:[%s2 + $0x28] sm:$0xff]
  %v55 = vld [vmem:[%s2 + $0x30] sm:$0xff]
  %v56 = vld [vmem:[%s2 + $0x38] sm:$0xff]
  %v57 = vld [vmem:[%s2 + $0x40] sm:$0xff]
  %v58 = vld [vmem:[%s2 + $0x48] sm:$0xff]
  %v59 = vld [vmem:[%s2 + $0x50] sm:$0xff]
  %v60 = vld [vmem:[%s2 + $0x58] sm:$0xff]
  %v61 = vld [vmem:[%s2 + $0x60] sm:$0xff]
  %v62 = vld [vmem:[%s2 + $0x68] sm:$0xff]
  %v63 = vld [vmem:[%s2 + $0x70] sm:$0xff]
  %v64 = vld [vmem:[%s2 + $0x78] sm:$0xff]
  %65 = vmatpush.msra.mxu0 %v64
  %66 = vmatpush.msra.mxu0 %v63
  %67 = vmatpush.msra.mxu0 %v62
  %68 = vmatpush.msra.mxu0 %v61
  %69 = vmatpush.msra.mxu0 %v60
  %70 = vmatpush.msra.mxu0 %v59
  %71 = vmatpush.msra.mxu0 %v58
  %72 = vmatpush.msra.mxu0 %v57
  %73 = vmatpush.msra.mxu0 %v56
  %74 = vmatpush.msra.mxu0 %v55
  %75 = vmatpush.msra.mxu0 %v54
  %76 = vmatpush.msra.mxu0 %v53
  %77 = vmatpush.msra.mxu0 %v52
  %78 = vmatpush.msra.mxu0 %v51
  %79 = vmatpush.msra.mxu0 %v50
  %80 = vmatpush.msra.mxu0 %v49
  %81 = vmatmul.f32.gmra.mxu0 %v33
  %v82 = vpop.f32.mrf.mxu0
  %v83 = vadd.f32 0.0, %v82
  %84 = vmatmul.f32.gmra.mxu0 %v34
  %v85 = vpop.f32.mrf.mxu0
  %v86 = vadd.f32 0.0, %v85
  %87 = vmatmul.f32.gmra.mxu0 %v35
  %v88 = vpop.f32.mrf.mxu0
  %v89 = vadd.f32 0.0, %v88
  %90 = vmatmul.f32.gmra.mxu0 %v36
  %v91 = vpop.f32.mrf.mxu0
  %v92 = vadd.f32 0.0, %v91
  %93 = vmatmul.f32.gmra.mxu0 %v37
  %v94 = vpop.f32.mrf.mxu0
  %v95 = vadd.f32 0.0, %v94
  %96 = vmatmul.f32.gmra.mxu0 %v38
  %v97 = vpop.f32.mrf.mxu0
  %v98 = vadd.f32 0.0, %v97
  %99 = vmatmul.f32.gmra.mxu0 %v39
  %v100 = vpop.f32.mrf.mxu0
  %v101 = vadd.f32 0.0, %v100
  %102 = vmatmul.f32.gmra.mxu0 %v40
  %v103 = vpop.f32.mrf.mxu0
  %v104 = vadd.f32 0.0, %v103
  %105 = vmatmul.f32.gmra.mxu0 %v41
  %v106 = vpop.f32.mrf.mxu0
  %v107 = vadd.f32 0.0, %v106
  %108 = vmatmul.f32.gmra.mxu0 %v42
  %v109 = vpop.f32.mrf.mxu0
  %v110 = vadd.f32 0.0, %v109
  %111 = vmatmul.f32.gmra.mxu0 %v43
  %v112 = vpop.f32.mrf.mxu0
  %v113 = vadd.f32 0.0, %v112
  %114 = vmatmul.f32.gmra.mxu0 %v44
  %v115 = vpop.f32.mrf.mxu0
  %v116 = vadd.f32 0.0, %v115
  %117 = vmatmul.f32.gmra.mxu0 %v45
  %v118 = vpop.f32.mrf.mxu0
  %v119 = vadd.f32 0.0, %v118
  %120 = vmatmul.f32.gmra.mxu0 %v46
  %v121 = vpop.f32.mrf.mxu0
  %v122 = vadd.f32 0.0, %v121
  %123 = vmatmul.f32.gmra.mxu0 %v47
  %v124 = vpop.f32.mrf.mxu0
  %v125 = vadd.f32 0.0, %v124
  %126 = vmatmul.f32.gmra.mxu0 %v48
  %v127 = vpop.f32.mrf.mxu0
  %v128 = vadd.f32 0.0, %v127
  %129 = vdwg.mxu0
  %v130 = vld [vmem:[%s3] sm:$0x1]
  %v132 = vperm.slane %v130, 0
  %134 = vmatpush.msra.mxu0 %v128
  %135 = vmatpush.msra.mxu0 %v125
  %136 = vmatpush.msra.mxu0 %v122
  %137 = vmatpush.msra.mxu0 %v119
  %138 = vmatpush.msra.mxu0 %v116
  %139 = vmatpush.msra.mxu0 %v113
  %140 = vmatpush.msra.mxu0 %v110
  %141 = vmatpush.msra.mxu0 %v107
  %142 = vmatpush.msra.mxu0 %v104
  %143 = vmatpush.msra.mxu0 %v101
  %144 = vmatpush.msra.mxu0 %v98
  %145 = vmatpush.msra.mxu0 %v95
  %146 = vmatpush.msra.mxu0 %v92
  %147 = vmatpush.msra.mxu0 %v89
  %148 = vmatpush.msra.mxu0 %v86
  %149 = vmatpush.msra.mxu0 %v83
  %150 = vmatmul.f32.gmra.mxu0 %v17
  %v151 = vpop.f32.mrf.mxu0
  %v152 = vadd.f32 %v132, %v151
  %153 = vmatmul.f32.gmra.mxu0 %v18
  %v154 = vpop.f32.mrf.mxu0
  %v155 = vadd.f32 %v132, %v154
  %156 = vmatmul.f32.gmra.mxu0 %v19
  %v157 = vpop.f32.mrf.mxu0
  %v158 = vadd.f32 %v132, %v157
  %159 = vmatmul.f32.gmra.mxu0 %v20
  %v160 = vpop.f32.mrf.mxu0
  %v161 = vadd.f32 %v132, %v160
  %162 = vmatmul.f32.gmra.mxu0 %v21
  %v163 = vpop.f32.mrf.mxu0
  %v164 = vadd.f32 %v132, %v163
  %165 = vmatmul.f32.gmra.mxu0 %v22
  %v166 = vpop.f32.mrf.mxu0
  %v167 = vadd.f32 %v132, %v166
  %168 = vmatmul.f32.gmra.mxu0 %v23
  %v169 = vpop.f32.mrf.mxu0
  %v170 = vadd.f32 %v132, %v169
  %171 = vmatmul.f32.gmra.mxu0 %v24
  %v172 = vpop.f32.mrf.mxu0
  %v173 = vadd.f32 %v132, %v172
  %174 = vmatmul.f32.gmra.mxu0 %v25
  %v175 = vpop.f32.mrf.mxu0
  %v176 = vadd.f32 %v132, %v175
  %177 = vmatmul.f32.gmra.mxu0 %v26
  %v178 = vpop.f32.mrf.mxu0
  %v179 = vadd.f32 %v132, %v178
  %180 = vmatmul.f32.gmra.mxu0 %v27
  %v181 = vpop.f32.mrf.mxu0
  %v182 = vadd.f32 %v132, %v181
  %183 = vmatmul.f32.gmra.mxu0 %v28
  %v184 = vpop.f32.mrf.mxu0
  %v185 = vadd.f32 %v132, %v184
  %186 = vmatmul.f32.gmra.mxu0 %v29
  %v187 = vpop.f32.mrf.mxu0
  %v188 = vadd.f32 %v132, %v187
  %189 = vmatmul.f32.gmra.mxu0 %v30
  %v190 = vpop.f32.mrf.mxu0
  %v191 = vadd.f32 %v132, %v190
  %192 = vmatmul.f32.gmra.mxu0 %v31
  %v193 = vpop.f32.mrf.mxu0
  %v194 = vadd.f32 %v132, %v193
  %195 = vmatmul.f32.gmra.mxu0 %v32
  %v196 = vpop.f32.mrf.mxu0
  %v197 = vadd.f32 %v132, %v196
  %198 = vdwg.mxu0
  %v199 = vmax.f32 %v152, 0.0
  %v200 = vmax.f32 %v155, 0.0
  %v201 = vmax.f32 %v158, 0.0
  %v202 = vmax.f32 %v161, 0.0
  %v203 = vmax.f32 %v164, 0.0
  %v204 = vmax.f32 %v167, 0.0
  %v205 = vmax.f32 %v170, 0.0
  %v206 = vmax.f32 %v173, 0.0
  %v207 = vmax.f32 %v176, 0.0
  %v208 = vmax.f32 %v179, 0.0
  %v209 = vmax.f32 %v182, 0.0
  %v210 = vmax.f32 %v185, 0.0
  %v211 = vmax.f32 %v188, 0.0
  %v212 = vmax.f32 %v191, 0.0
  %v213 = vmax.f32 %v194, 0.0
  %v214 = vmax.f32 %v197, 0.0
  %s215 = scalar_lea.vmem %s2, 128
  %v216 = vld [vmem:[%s215] sm:$0xff]
  %v217 = vld [vmem:[%s215 + $0x8] sm:$0xff]
  %v218 = vld [vmem:[%s215 + $0x10] sm:$0xff]
  %v219 = vld [vmem:[%s215 + $0x18] sm:$0xff]
  %v220 = vld [vmem:[%s215 + $0x20] sm:$0xff]
  %v221 = vld [vmem:[%s215 + $0x28] sm:$0xff]
  %v222 = vld [vmem:[%s215 + $0x30] sm:$0xff]
  %v223 = vld [vmem:[%s215 + $0x38] sm:$0xff]
  %v224 = vld [vmem:[%s215 + $0x40] sm:$0xff]
  %v225 = vld [vmem:[%s215 + $0x48] sm:$0xff]
  %v226 = vld [vmem:[%s215 + $0x50] sm:$0xff]
  %v227 = vld [vmem:[%s215 + $0x58] sm:$0xff]
  %v228 = vld [vmem:[%s215 + $0x60] sm:$0xff]
  %v229 = vld [vmem:[%s215 + $0x68] sm:$0xff]
  %v230 = vld [vmem:[%s215 + $0x70] sm:$0xff]
  %v231 = vld [vmem:[%s215 + $0x78] sm:$0xff]
  %232 = vmatpush.msra.mxu0 %v231
  %233 = vmatpush.msra.mxu0 %v230
  %234 = vmatpush.msra.mxu0 %v229
  %235 = vmatpush.msra.mxu0 %v228
  %236 = vmatpush.msra.mxu0 %v227
  %237 = vmatpush.msra.mxu0 %v226
  %238 = vmatpush.msra.mxu0 %v225
  %239 = vmatpush.msra.mxu0 %v224
  %240 = vmatpush.msra.mxu0 %v223
  %241 = vmatpush.msra.mxu0 %v222
  %242 = vmatpush.msra.mxu0 %v221
  %243 = vmatpush.msra.mxu0 %v220
  %244 = vmatpush.msra.mxu0 %v219
  %245 = vmatpush.msra.mxu0 %v218
  %246 = vmatpush.msra.mxu0 %v217
  %247 = vmatpush.msra.mxu0 %v216
  %248 = vmatmul.f32.gmra.mxu0 %v199
  %v249 = vpop.f32.mrf.mxu0
  %v250 = vadd.f32 0.0, %v249
  %251 = vmatmul.f32.gmra.mxu0 %v200
  %v252 = vpop.f32.mrf.mxu0
  %v253 = vadd.f32 0.0, %v252
  %254 = vmatmul.f32.gmra.mxu0 %v201
  %v255 = vpop.f32.mrf.mxu0
  %v256 = vadd.f32 0.0, %v255
  %257 = vmatmul.f32.gmra.mxu0 %v202
  %v258 = vpop.f32.mrf.mxu0
  %v259 = vadd.f32 0.0, %v258
  %260 = vmatmul.f32.gmra.mxu0 %v203
  %v261 = vpop.f32.mrf.mxu0
  %v262 = vadd.f32 0.0, %v261
  %263 = vmatmul.f32.gmra.mxu0 %v204
  %v264 = vpop.f32.mrf.mxu0
  %v265 = vadd.f32 0.0, %v264
  %266 = vmatmul.f32.gmra.mxu0 %v205
  %v267 = vpop.f32.mrf.mxu0
  %v268 = vadd.f32 0.0, %v267
  %269 = vmatmul.f32.gmra.mxu0 %v206
  %v270 = vpop.f32.mrf.mxu0
  %v271 = vadd.f32 0.0, %v270
  %272 = vmatmul.f32.gmra.mxu0 %v207
  %v273 = vpop.f32.mrf.mxu0
  %v274 = vadd.f32 0.0, %v273
  %275 = vmatmul.f32.gmra.mxu0 %v208
  %v276 = vpop.f32.mrf.mxu0
  %v277 = vadd.f32 0.0, %v276
  %278 = vmatmul.f32.gmra.mxu0 %v209
  %v279 = vpop.f32.mrf.mxu0
  %v280 = vadd.f32 0.0, %v279
  %281 = vmatmul.f32.gmra.mxu0 %v210
  %v282 = vpop.f32.mrf.mxu0
  %v283 = vadd.f32 0.0, %v282
  %284 = vmatmul.f32.gmra.mxu0 %v211
  %v285 = vpop.f32.mrf.mxu0
  %v286 = vadd.f32 0.0, %v285
  %287 = vmatmul.f32.gmra.mxu0 %v212
  %v288 = vpop.f32.mrf.mxu0
  %v289 = vadd.f32 0.0, %v288
  %290 = vmatmul.f32.gmra.mxu0 %v213
  %v291 = vpop.f32.mrf.mxu0
  %v292 = vadd.f32 0.0, %v291
  %293 = vmatmul.f32.gmra.mxu0 %v214
  %v294 = vpop.f32.mrf.mxu0
  %v295 = vadd.f32 0.0, %v294
  %296 = vdwg.mxu0
  %s297 = scalar_lea.vmem %s3, 1
  %v298 = vld [vmem:[%s297] sm:$0x1]
  %v300 = vperm.slane %v298, 0
  %302 = vmatpush.msra.mxu0 %v295
  %303 = vmatpush.msra.mxu0 %v292
  %304 = vmatpush.msra.mxu0 %v289
  %305 = vmatpush.msra.mxu0 %v286
  %306 = vmatpush.msra.mxu0 %v283
  %307 = vmatpush.msra.mxu0 %v280
  %308 = vmatpush.msra.mxu0 %v277
  %309 = vmatpush.msra.mxu0 %v274
  %310 = vmatpush.msra.mxu0 %v271
  %311 = vmatpush.msra.mxu0 %v268
  %312 = vmatpush.msra.mxu0 %v265
  %313 = vmatpush.msra.mxu0 %v262
  %314 = vmatpush.msra.mxu0 %v259
  %315 = vmatpush.msra.mxu0 %v256
  %316 = vmatpush.msra.mxu0 %v253
  %317 = vmatpush.msra.mxu0 %v250
  %318 = vmatmul.f32.gmra.mxu0 %v17
  %v319 = vpop.f32.mrf.mxu0
  %v320 = vadd.f32 %v300, %v319
  %321 = vmatmul.f32.gmra.mxu0 %v18
  %v322 = vpop.f32.mrf.mxu0
  %v323 = vadd.f32 %v300, %v322
  %324 = vmatmul.f32.gmra.mxu0 %v19
  %v325 = vpop.f32.mrf.mxu0
  %v326 = vadd.f32 %v300, %v325
  %327 = vmatmul.f32.gmra.mxu0 %v20
  %v328 = vpop.f32.mrf.mxu0
  %v329 = vadd.f32 %v300, %v328
  %330 = vmatmul.f32.gmra.mxu0 %v21
  %v331 = vpop.f32.mrf.mxu0
  %v332 = vadd.f32 %v300, %v331
  %333 = vmatmul.f32.gmra.mxu0 %v22
  %v334 = vpop.f32.mrf.mxu0
  %v335 = vadd.f32 %v300, %v334
  %336 = vmatmul.f32.gmra.mxu0 %v23
  %v337 = vpop.f32.mrf.mxu0
  %v338 = vadd.f32 %v300, %v337
  %339 = vmatmul.f32.gmra.mxu0 %v24
  %v340 = vpop.f32.mrf.mxu0
  %v341 = vadd.f32 %v300, %v340
  %342 = vmatmul.f32.gmra.mxu0 %v25
  %v343 = vpop.f32.mrf.mxu0
  %v344 = vadd.f32 %v300, %v343
  %345 = vmatmul.f32.gmra.mxu0 %v26
  %v346 = vpop.f32.mrf.mxu0
  %v347 = vadd.f32 %v300, %v346
  %348 = vmatmul.f32.gmra.mxu0 %v27
  %v349 = vpop.f32.mrf.mxu0
  %v350 = vadd.f32 %v300, %v349
  %351 = vmatmul.f32.gmra.mxu0 %v28
  %v352 = vpop.f32.mrf.mxu0
  %v353 = vadd.f32 %v300, %v352
  %354 = vmatmul.f32.gmra.mxu0 %v29
  %v355 = vpop.f32.mrf.mxu0
  %v356 = vadd.f32 %v300, %v355
  %357 = vmatmul.f32.gmra.mxu0 %v30
  %v358 = vpop.f32.mrf.mxu0
  %v359 = vadd.f32 %v300, %v358
  %360 = vmatmul.f32.gmra.mxu0 %v31
  %v361 = vpop.f32.mrf.mxu0
  %v362 = vadd.f32 %v300, %v361
  %363 = vmatmul.f32.gmra.mxu0 %v32
  %v364 = vpop.f32.mrf.mxu0
  %v365 = vadd.f32 %v300, %v364
  %366 = vdwg.mxu0
  %367 = vst [vmem:[%s4] sm:$0xff] %v320
  %368 = vst [vmem:[%s4 + $0x8] sm:$0xff] %v323
  %369 = vst [vmem:[%s4 + $0x10] sm:$0xff] %v326
  %370 = vst [vmem:[%s4 + $0x18] sm:$0xff] %v329
  %371 = vst [vmem:[%s4 + $0x20] sm:$0xff] %v332
  %372 = vst [vmem:[%s4 + $0x28] sm:$0xff] %v335
  %373 = vst [vmem:[%s4 + $0x30] sm:$0xff] %v338
  %374 = vst [vmem:[%s4 + $0x38] sm:$0xff] %v341
  %375 = vst [vmem:[%s4 + $0x40] sm:$0xff] %v344
  %376 = vst [vmem:[%s4 + $0x48] sm:$0xff] %v347
  %377 = vst [vmem:[%s4 + $0x50] sm:$0xff] %v350
  %378 = vst [vmem:[%s4 + $0x58] sm:$0xff] %v353
  %379 = vst [vmem:[%s4 + $0x60] sm:$0xff] %v356
  %380 = vst [vmem:[%s4 + $0x68] sm:$0xff] %v359
  %381 = vst [vmem:[%s4 + $0x70] sm:$0xff] %v362
  %382 = vst [vmem:[%s4 + $0x78] sm:$0xff] %v365
  // Predicated region
  $region18: #{gcn_forward.1} parent=0 // pred_check
    _
  $region19: #{gcn_forward.1} parent=0 // pred_check_branch
    %384 = sbr.rel (0) target = $region21
  $region20: #{gcn_forward.1} parent=0 // pred_region
    _
  $region21: #{gcn_forward.1} parent=0 // pred_fallthru
    _
  // Predicated region
  $region22: #{gcn_forward.1} parent=0 // pred_check
    _
  $region23: #{gcn_forward.1} parent=0 // pred_check_branch
    %386 = sbr.rel (0) target = $region25
  $region24: #{gcn_forward.1} parent=0 // pred_region
    _
  $region25: #{gcn_forward.1} parent=0 // pred_fallthru
    _

</llo_original>
